<compile_context>
chip_gen: v6e
topology: v6e:2x2x1
jax: 0.10.0
libtpu: 0.0.40
codegen_flags: <defaults>
</compile_context>

<pallas_src>
import functools

import jax
import jax.numpy as jnp
from jax.experimental import pallas as pl
from jax.experimental.pallas import tpu as pltpu


def _round_up(x, m):
    return ((x + m - 1) // m) * m


def _normal_loss_kernel(f_ref, r_ref, sel2_ref, o_ref, acc_ref, *,
                        n_rows, pack, tile, steps, needs_mask):
    c = pl.program_id(0)            # partial (TensorCore) index
    s = pl.program_id(1)            # step along the packed-row (reduction) axis

    # Zero the single-vreg accumulator at the start of each partial's loop.
    @pl.when(s == 0)
    def _():
        acc_ref[...] = jnp.zeros_like(acc_ref)

    f = f_ref[...].astype(jnp.float32)          # (tile, L), lane-dense
    r = r_ref[...].astype(jnp.float32)          # (tile, L)
    sel2 = sel2_ref[...]                        # (2L, pack) 0/1 selection, bf16

    def seg_sum(p):
        # Exact-enough f32 segmented sum on the MXU with DEFAULT-precision
        # bf16 passes: p ~= hi + lo (residual ~2^-17 relative); hi|lo are
        # concatenated along K so one K=2L dot does hi@sel + lo@sel in a
        # single pass on a 256-deep MXU (v6e/v7x).
        hi = p.astype(jnp.bfloat16)
        lo = (p - hi.astype(jnp.float32)).astype(jnp.bfloat16)
        return jnp.dot(jnp.concatenate([hi, lo], axis=-1), sel2,
                       preferred_element_type=jnp.float32)

    sum_fr = seg_sum(f * r)                     # (tile, pack)
    sum_ff = seg_sum(f * f)
    sum_rr = seg_sum(r * r)

    # cos = <f, r> / (|f| |r|).  Two rsqrt (EUP slot) instead of sqrt+sqrt+div;
    # kept in rsqrt(ff)*rsqrt(rr) form to avoid overflowing ff*rr.  No epsilon,
    # matching the original torch module (which divides directly).
    cos = sum_fr * jax.lax.rsqrt(sum_ff) * jax.lax.rsqrt(sum_rr)

    def reduce_to_acc(x):
        # (tile, pack) -> (8, pack): pure vreg-wise VALU adds, no cross-lane
        # movement; the final cross-sublane/lane reduce happens once per
        # partial on the last step.
        return jnp.sum(x.reshape(tile // 8, 8, pack), axis=0)

    if needs_mask:
        blk = c * steps + s
        # Whole block maps to valid logical rows?  (Also false for fully
        # out-of-range clamped steps, which then contribute exactly 0.)
        full = (blk + 1) * tile * pack <= n_rows

        @pl.when(full)
        def _():
            acc_ref[...] += reduce_to_acc(cos)

        @pl.when(jnp.logical_not(full))
        def _():
            sub = jax.lax.broadcasted_iota(jnp.int32, (tile, pack), 0)
            grp = jax.lax.broadcasted_iota(jnp.int32, (tile, pack), 1)
            row_idx = (blk * tile + sub) * pack + grp
            acc_ref[...] += reduce_to_acc(jnp.where(row_idx < n_rows, cos, 0.0))
    else:
        acc_ref[...] += reduce_to_acc(cos)

    # Finalize: one cross-lane reduction per partial, on its last step only.
    @pl.when(s == pl.num_programs(1) - 1)
    def _():
        o_ref[...] = jnp.zeros_like(o_ref) + jnp.sum(acc_ref[...])


def normal_loss(grad_fake, grad_real, *, row_tile=8192, num_partials=2):
    """Pallas implementation of NormalLoss.forward for equal-shaped inputs.

    Computes 1 - mean(cos_sim(grad_fake, grad_real) over the last axis).
    bf16 inputs are supported (cast to f32 in-kernel).
    """
    # TODO(synk): the mismatched-shape path (bilinear F.interpolate with
    # align_corners=True on a 3-D tensor) is not implemented in the kernel.
    assert grad_fake.shape == grad_real.shape, "shapes must match"
    *lead, D = grad_real.shape
    rows = 1
    for d in lead:
        rows *= d
    assert rows > 0 and D > 0

    # Lane-dense packing: `pack` logical rows of length D per 128-lane row.
    pack = (128 // D) if (D <= 128 and 128 % D == 0) else 1
    L = pack * D
    r_packed = -(-rows // pack)                 # packed data rows

    # Sub-32-bit dtypes need the second-minor block dim to be a multiple of 16
    # (32 for int8); f32 only needs 8.
    itemsize = min(jnp.dtype(grad_fake.dtype).itemsize,
                   jnp.dtype(grad_real.dtype).itemsize)
    min_rows = {4: 8, 2: 16, 1: 32}.get(int(itemsize), 8)

    tile = _round_up(min(row_tile, r_packed), min_rows)
    n_blocks = -(-r_packed // tile)
    ncores = num_partials if n_blocks >= num_partials else 1
    steps = -(-n_blocks // ncores)

    # Lane-dense view.  Free (pure reshape) whenever rows % pack == 0; only a
    # ragged tail needs a minimal (< L elements) pad to make the flat buffer
    # reshapeable -- never whole tiles of padding.
    f = grad_fake.reshape(-1)
    r = grad_real.reshape(-1)
    pad = r_packed * L - rows * D
    if pad:
        f = jnp.pad(f, (0, pad))
        r = jnp.pad(r, (0, pad))
    f = f.reshape(r_packed, L)
    r = r.reshape(r_packed, L)

    # 0/1 selection matrix (bf16 is exact for 0/1) mapping the L lanes to their
    # `pack` groups, duplicated along K for the hi|lo concatenated dot.
    sel = (jnp.arange(L, dtype=jnp.int32)[:, None] // D
           == jnp.arange(pack, dtype=jnp.int32)[None, :]).astype(jnp.bfloat16)
    sel2 = jnp.concatenate([sel, sel], axis=0)                 # (2L, pack)

    # Masking only needed if the grid covers more logical rows than exist
    # (partial last tile, ragged pack tail, or clamped out-of-range steps).
    needs_mask = (ncores * steps * tile * pack) != rows

    kernel = functools.partial(
        _normal_loss_kernel,
        n_rows=rows, pack=pack, tile=tile, steps=steps, needs_mask=needs_mask)

    # VMEM budget: 2 inputs x 2 pipeline buffers x (tile, L) blocks (+ tiny
    # sel2 / output / (8, pack) accumulator).
    buf_bytes = 2 * tile * L * (jnp.dtype(grad_fake.dtype).itemsize
                                + jnp.dtype(grad_real.dtype).itemsize)
    vmem_limit = int(max(32 * 2**20, min(int(1.5 * buf_bytes), 64 * 2**20)))

    def _in_map(c, s):
        # Clamp so an odd block count split over 2 partials never DMAs past
        # the array; the clamped (duplicate) step is fully masked in-kernel.
        return (jnp.minimum(c * steps + s, n_blocks - 1), 0)

    partials = pl.pallas_call(
        kernel,
        out_shape=jax.ShapeDtypeStruct((ncores, 8, 128), jnp.float32),
        grid_spec=pltpu.PrefetchScalarGridSpec(
            num_scalar_prefetch=0,
            grid=(ncores, steps),
            in_specs=[
                pl.BlockSpec((tile, L), _in_map),
                pl.BlockSpec((tile, L), _in_map),
                pl.BlockSpec((2 * L, pack), lambda c, s: (0, 0)),  # resident
            ],
            out_specs=pl.BlockSpec((1, 8, 128), lambda c, s: (c, 0, 0)),
            scratch_shapes=[pltpu.VMEM((8, pack), jnp.float32)],
        ),
        compiler_params=pltpu.CompilerParams(
            dimension_semantics=("parallel", "arbitrary"),
            vmem_limit_bytes=vmem_limit),
    )(f, r, sel2)

    total = jnp.sum(partials[:, 0, 0])
    return jnp.float32(1.0) - total / jnp.float32(rows)


def _normal_loss_ref(grad_fake, grad_real):
    prod = jnp.sum(grad_fake * grad_real, axis=-1)
    fake_norm = jnp.sqrt(jnp.sum(grad_fake ** 2, axis=-1))
    real_norm = jnp.sqrt(jnp.sum(grad_real ** 2, axis=-1))
    return 1.0 - jnp.mean(prod / (fake_norm * real_norm))


if __name__ == "__main__":
    key = jax.random.PRNGKey(0)
    k1, k2, k3, k4 = jax.random.split(key, 4)

    # Primary case: (B, N, D) with D=32 -> lane-dense pack=4, single block,
    # no masking (fast path).
    B, N, D = 2, 64, 32
    gf = jax.random.normal(k1, (B, N, D), dtype=jnp.float32)
    gr = jax.random.normal(k2, (B, N, D), dtype=jnp.float32)
    loss = jax.block_until_ready(normal_loss(gf, gr))
    ref = jax.block_until_ready(_normal_loss_ref(gf, gr))
    assert jnp.allclose(loss, ref, atol=2e-5, rtol=2e-5), (loss, ref)

    # Partial last tile + two-partial ("parallel") grid path, even block count.
    gf2 = jax.random.normal(k3, (2, 300, 32), dtype=jnp.float32)
    gr2 = jax.random.normal(k4, (2, 300, 32), dtype=jnp.float32)
    loss2 = jax.block_until_ready(normal_loss(gf2, gr2, row_tile=16))
    ref2 = jax.block_until_ready(_normal_loss_ref(gf2, gr2))
    assert jnp.allclose(loss2, ref2, atol=2e-5, rtol=2e-5), (loss2, ref2)

    # Odd block count -> clamped index_map + fully-masked trailing step.
    loss3 = jax.block_until_ready(normal_loss(gf2, gr2, row_tile=24))
    assert jnp.allclose(loss3, ref2, atol=2e-5, rtol=2e-5), (loss3, ref2)

    # bf16 inputs (halve HBM read traffic); cast to f32 happens in-kernel.
    gf_b = gf.astype(jnp.bfloat16)
    gr_b = gr.astype(jnp.bfloat16)
    loss4 = jax.block_until_ready(normal_loss(gf_b, gr_b))
    ref4 = _normal_loss_ref(gf_b.astype(jnp.float32), gr_b.astype(jnp.float32))
    assert jnp.allclose(loss4, ref4, atol=1e-4, rtol=1e-4), (loss4, ref4)

    print("KERNEL_OK")
</pallas_src>

<mosaic_0001>
module attributes {stable_mosaic.version = 11 : i64} {
  func.func @_normal_loss_kernel(%arg0: i32, %arg1: i32, %arg2: memref<32x128xf32, #tpu.memory_space<vmem>>, %arg3: memref<32x128xf32, #tpu.memory_space<vmem>>, %arg4: memref<256x4xbf16, #tpu.memory_space<vmem>>, %arg5: memref<1x8x128xf32, #tpu.memory_space<vmem>>, %arg6: memref<8x4xf32, #tpu.memory_space<vmem>>) attributes {dimension_semantics = [#tpu.dimension_semantics<parallel>, #tpu.dimension_semantics<arbitrary>], iteration_bounds = array<i64: 1, 1>, scalar_prefetch = 0 : i64, scratch_operands = 1 : i64, tpu.core_type = #tpu.core_type<tc>, window_params = [{transform_indices = @transform_0, window_bounds = array<i64: 32, 128>}, {transform_indices = @transform_1, window_bounds = array<i64: 32, 128>}, {pipeline_mode = #tpu.pipeline_mode<synchronous>, transform_indices = @transform_2, window_bounds = array<i64: 256, 4>}, {transform_indices = @transform_3, window_bounds = array<i64: 1, 8, 128>}]} {
    %c0_i32 = arith.constant 0 : i32
    %0 = arith.cmpi eq, %arg1, %c0_i32 : i32
    %1 = arith.extui %0 : i1 to i32
    %c0_i32_0 = arith.constant 0 : i32
    %2 = arith.cmpi ne, %1, %c0_i32_0 : i32
    scf.if %2 {
      %cst_15 = arith.constant 0.000000e+00 : f32
      %39 = vector.broadcast %cst_15 : f32 to vector<8x4xf32>
      %c0_16 = arith.constant 0 : index
      %c0_17 = arith.constant 0 : index
      %40 = vector.load %arg6[%c0_16, %c0_17] : memref<8x4xf32, #tpu.memory_space<vmem>>, vector<8x4xf32>
      tpu.vector_store %arg6[%c0_16, %c0_17], %39 {strides = array<i32>} : memref<8x4xf32, #tpu.memory_space<vmem>>, vector<8x4xf32>,
    } else {
    }
    %c0 = arith.constant 0 : index
    %c0_1 = arith.constant 0 : index
    %3 = vector.load %arg2[%c0, %c0_1] : memref<32x128xf32, #tpu.memory_space<vmem>>, vector<32x128xf32>
    %c0_2 = arith.constant 0 : index
    %c0_3 = arith.constant 0 : index
    %4 = vector.load %arg3[%c0_2, %c0_3] : memref<32x128xf32, #tpu.memory_space<vmem>>, vector<32x128xf32>
    %c0_4 = arith.constant 0 : index
    %c0_5 = arith.constant 0 : index
    %5 = vector.load %arg4[%c0_4, %c0_5] : memref<256x4xbf16, #tpu.memory_space<vmem>>, vector<256x4xbf16>
    %6 = arith.mulf %3, %4 : vector<32x128xf32>
    %7 = arith.truncf %6 : vector<32x128xf32> to vector<32x128xbf16>
    %8 = arith.extf %7 : vector<32x128xbf16> to vector<32x128xf32>
    %9 = arith.subf %6, %8 : vector<32x128xf32>
    %10 = arith.truncf %9 : vector<32x128xf32> to vector<32x128xbf16>
    %11 = tpu.concatenate %7, %10 in 1 : vector<32x128xbf16>, vector<32x128xbf16> -> vector<32x256xbf16>
    %cst = arith.constant dense<0.000000e+00> : vector<32x4xf32>
    %12 = tpu.matmul %11, %5, %cst {dimension_numbers = #tpu.dot_dimension_numbers<[1], [0], [0], [1], [0, 0, 1, 1], [], []>} : vector<32x256xbf16>, vector<256x4xbf16>, vector<32x4xf32> -> vector<32x4xf32>
    %13 = arith.mulf %3, %3 : vector<32x128xf32>
    %14 = arith.truncf %13 : vector<32x128xf32> to vector<32x128xbf16>
    %15 = arith.extf %14 : vector<32x128xbf16> to vector<32x128xf32>
    %16 = arith.subf %13, %15 : vector<32x128xf32>
    %17 = arith.truncf %16 : vector<32x128xf32> to vector<32x128xbf16>
    %18 = tpu.concatenate %14, %17 in 1 : vector<32x128xbf16>, vector<32x128xbf16> -> vector<32x256xbf16>
    %cst_6 = arith.constant dense<0.000000e+00> : vector<32x4xf32>
    %19 = tpu.matmul %18, %5, %cst_6 {dimension_numbers = #tpu.dot_dimension_numbers<[1], [0], [0], [1], [0, 0, 1, 1], [], []>} : vector<32x256xbf16>, vector<256x4xbf16>, vector<32x4xf32> -> vector<32x4xf32>
    %20 = arith.mulf %4, %4 : vector<32x128xf32>
    %21 = arith.truncf %20 : vector<32x128xf32> to vector<32x128xbf16>
    %22 = arith.extf %21 : vector<32x128xbf16> to vector<32x128xf32>
    %23 = arith.subf %20, %22 : vector<32x128xf32>
    %24 = arith.truncf %23 : vector<32x128xf32> to vector<32x128xbf16>
    %25 = tpu.concatenate %21, %24 in 1 : vector<32x128xbf16>, vector<32x128xbf16> -> vector<32x256xbf16>
    %cst_7 = arith.constant dense<0.000000e+00> : vector<32x4xf32>
    %26 = tpu.matmul %25, %5, %cst_7 {dimension_numbers = #tpu.dot_dimension_numbers<[1], [0], [0], [1], [0, 0, 1, 1], [], []>} : vector<32x256xbf16>, vector<256x4xbf16>, vector<32x4xf32> -> vector<32x4xf32>
    %27 = math.rsqrt %19 : vector<32x4xf32>
    %28 = arith.mulf %12, %27 : vector<32x4xf32>
    %29 = math.rsqrt %26 : vector<32x4xf32>
    %30 = arith.mulf %28, %29 : vector<32x4xf32>
    %c0_8 = arith.constant 0 : index
    %c0_9 = arith.constant 0 : index
    %31 = vector.load %arg6[%c0_8, %c0_9] : memref<8x4xf32, #tpu.memory_space<vmem>>, vector<8x4xf32>
    %32 = vector.shape_cast %30 : vector<32x4xf32> to vector<4x8x4xf32>
    %cst_10 = arith.constant dense<0.000000e+00> : vector<8x4xf32>
    %33 = vector.multi_reduction <add>, %32, %cst_10 [0] : vector<4x8x4xf32> to vector<8x4xf32>
    %34 = arith.addf %31, %33 : vector<8x4xf32>
    %c0_11 = arith.constant 0 : index
    %c0_12 = arith.constant 0 : index
    %35 = vector.load %arg6[%c0_11, %c0_12] : memref<8x4xf32, #tpu.memory_space<vmem>>, vector<8x4xf32>
    tpu.vector_store %arg6[%c0_11, %c0_12], %34 {strides = array<i32>} : memref<8x4xf32, #tpu.memory_space<vmem>>, vector<8x4xf32>,
    %c0_i32_13 = arith.constant 0 : i32
    %36 = arith.cmpi eq, %arg1, %c0_i32_13 : i32
    %37 = arith.extui %36 : i1 to i32
    %c0_i32_14 = arith.constant 0 : i32
    %38 = arith.cmpi ne, %37, %c0_i32_14 : i32
    scf.if %38 {
      %cst_15 = arith.constant 0.000000e+00 : f32
      %39 = vector.broadcast %cst_15 : f32 to vector<1x8x128xf32>
      %c0_16 = arith.constant 0 : index
      %c0_17 = arith.constant 0 : index
      %40 = vector.load %arg6[%c0_16, %c0_17] : memref<8x4xf32, #tpu.memory_space<vmem>>, vector<8x4xf32>
      %41 = vector.shape_cast %40 : vector<8x4xf32> to vector<1x8x4xf32>
      %cst_18 = arith.constant dense<0.000000e+00> : vector<1xf32>
      %42 = vector.multi_reduction <add>, %41, %cst_18 [1, 2] : vector<1x8x4xf32> to vector<1xf32>
      %43 = vector.shape_cast %42 : vector<1xf32> to vector<1x1x1xf32>
      %44 = vector.extract %43[0, 0, 0] : f32 from vector<1x1x1xf32>
      %45 = vector.broadcast %44 : f32 to vector<1x8x128xf32>
      %46 = arith.addf %39, %45 : vector<1x8x128xf32>
      %c0_19 = arith.constant 0 : index
      %c0_20 = arith.constant 0 : index
      %c0_21 = arith.constant 0 : index
      %47 = vector.load %arg5[%c0_19, %c0_20, %c0_21] : memref<1x8x128xf32, #tpu.memory_space<vmem>>, vector<1x8x128xf32>
      tpu.vector_store %arg5[%c0_19, %c0_20, %c0_21], %46 {strides = array<i32>} : memref<1x8x128xf32, #tpu.memory_space<vmem>>, vector<1x8x128xf32>,
    } else {
    }
    return
  }
  func.func @transform_0(%arg0: i32, %arg1: i32) -> (i32, i32) {
    %c1_i32 = arith.constant 1 : i32
    %0 = arith.muli %arg0, %c1_i32 : i32
    %1 = arith.addi %0, %arg1 : i32
    %c0_i32 = arith.constant 0 : i32
    %2 = arith.minsi %1, %c0_i32 : i32
    %c0_i32_0 = arith.constant 0 : i32
    %c0_i32_1 = arith.constant 0 : i32
    return %2, %c0_i32_0 : i32, i32
  }
  func.func @transform_1(%arg0: i32, %arg1: i32) -> (i32, i32) {
    %c1_i32 = arith.constant 1 : i32
    %0 = arith.muli %arg0, %c1_i32 : i32
    %1 = arith.addi %0, %arg1 : i32
    %c0_i32 = arith.constant 0 : i32
    %2 = arith.minsi %1, %c0_i32 : i32
    %c0_i32_0 = arith.constant 0 : i32
    %c0_i32_1 = arith.constant 0 : i32
    return %2, %c0_i32_0 : i32, i32
  }
  func.func @transform_2(%arg0: i32, %arg1: i32) -> (i32, i32) {
    %c0_i32 = arith.constant 0 : i32
    %c0_i32_0 = arith.constant 0 : i32
    %c0_i32_1 = arith.constant 0 : i32
    return %c0_i32, %c0_i32_0 : i32, i32
  }
  func.func @transform_3(%arg0: i32, %arg1: i32) -> (i32, i32, i32) {
    %c0_i32 = arith.constant 0 : i32
    %c0_i32_0 = arith.constant 0 : i32
    %c0_i32_1 = arith.constant 0 : i32
    return %arg0, %c0_i32, %c0_i32_0 : i32, i32, i32
  }
}

</mosaic_0001>

<llo_original>
// kernel: tpu_custom_call.1
$region0: #{tpu_custom_call.1}
  #allocation0 [shape = 'u32[]', space=smem, size = 0x4, offset = 0x4, fixed_abs, tag = 'smem constant byte address 0x4 - core index']
  #allocation1 [shape = 'u32[144,128]{1,0:T(1,128)}', space=vmem, size = 0x12000, scoped, tag = 'internal scratch']
  #allocation2 [shape = 'f32[8,4]{1,0:T(8,128)}', space=vmem, size = 0x1000, scoped, tag = 'scratch operand']
  %s0 = inlined_call_operand.vmem [shape: f32[32,128], index: 0, kind: input, shape index: {}]
  %s1 = inlined_call_operand.vmem [shape: f32[32,128], index: 1, kind: input, shape index: {}]
  %s2 = inlined_call_operand.vmem [shape: bf16[256,4], index: 2, kind: input, shape index: {}]
  %s3 = inlined_call_operand.hbm [shape: f32[1,8,128], index: 3, kind: output, shape index: {}]
  %s4 = sld [smem:[#allocation0]]
  $region30: #{tpu_custom_call.1} parent=0
    _
  %s6 = ssub.s32 1, %s4
  %s7 = scalar_select 0, %s6, %s4
  $region1: #{tpu_custom_call.1} parent=0
    #allocation3 [shape = 'u8[4096]{0}', space=vmem, size = 0x1000, scoped, tag = 'output window, operand 0, single buffered']
    #allocation4 [shape = 's32[1]{0}', space=sflag, size = 0x4, scoped, tag = 'scoped memory for tpu_custom_call.1']
    %8 = vsyncpa [#allocation4], 0
    // Predicated region
    $region2: #{tpu_custom_call.1} parent=1 // pred_check
      _
    $region3: #{tpu_custom_call.1} parent=1 // pred_check_branch
      %10 = sbr.rel (0) target = $region5
    $region4: #{tpu_custom_call.1} parent=1 // pred_region
      %s11 = sadd.s32 0, 0
      %p12 = scmp.lt.s32.totalorder %s11, 0
      %s13 = scalar_select %p12, %s11, 0
      %s14 = smul.u32 4, %s13
      %p15 = scmp.lt.s32.totalorder %s14, 3
      %s16 = scalar_select %p15, %s14, 3
      %s17 = smul.addr %s16, 8
      %s18 = scalar_lea.vmem %s0, %s17
      %s19 = sadd.s32 0, 0
      %p20 = scmp.lt.s32.totalorder %s19, 0
      %s21 = scalar_select %p20, %s19, 0
      %s22 = smul.u32 4, %s21
    $region5: #{tpu_custom_call.1} parent=1 // pred_fallthru
      _
    // Predicated region
    $region6: #{tpu_custom_call.1} parent=1 // pred_check
      _
    $region7: #{tpu_custom_call.1} parent=1 // pred_check_branch
      %24 = sbr.rel (0) target = $region9
    $region8: #{tpu_custom_call.1} parent=1 // pred_region
      %s25 = sadd.s32 0, 0
      %p26 = scmp.lt.s32.totalorder %s25, 0
      %s27 = scalar_select %p26, %s25, 0
      %s28 = smul.u32 4, %s27
      %p29 = scmp.lt.s32.totalorder %s28, 3
      %s30 = scalar_select %p29, %s28, 3
      %s31 = smul.addr %s30, 8
      %s32 = scalar_lea.vmem %s1, %s31
      %s33 = sadd.s32 0, 0
      %p34 = scmp.lt.s32.totalorder %s33, 0
      %s35 = scalar_select %p34, %s33, 0
      %s36 = smul.u32 4, %s35
    $region9: #{tpu_custom_call.1} parent=1 // pred_fallthru
      _
    // Predicated region
    $region10: #{tpu_custom_call.1} parent=1 // pred_check
      _
    $region11: #{tpu_custom_call.1} parent=1 // pred_check_branch
      %38 = sbr.rel (0) target = $region13
    $region12: #{tpu_custom_call.1} parent=1 // pred_region
      _
    $region13: #{tpu_custom_call.1} parent=1 // pred_fallthru
      _
    %s39 = sadd.s32 0, 0
    %p40 = scmp.lt.s32.totalorder %s39, 0
    %s41 = scalar_select %p40, %s39, 0
    %s42 = smul.u32 4, %s41
    %p43 = scmp.lt.s32.totalorder %s42, 3
    %s44 = scalar_select %p43, %s42, 3
    %s45 = smul.addr %s44, 8
    %s46 = scalar_lea.vmem %s0, %s45
    %s47 = sadd.s32 0, 0
    %p48 = scmp.lt.s32.totalorder %s47, 0
    %s49 = scalar_select %p48, %s47, 0
    %s50 = smul.u32 4, %s49
    %p51 = scmp.lt.s32.totalorder %s50, 3
    %s52 = scalar_select %p51, %s50, 3
    %s53 = smul.addr %s52, 8
    %s54 = scalar_lea.vmem %s1, %s53
    %s55 = sadd.s32 0, 0
    %p56 = scmp.lt.s32.totalorder %s55, 0
    %s57 = scalar_select %p56, %s55, 0
    %s58 = smul.u32 4, %s57
    %p59 = scmp.lt.s32.totalorder %s58, 3
    %s60 = scalar_select %p59, %s58, 3
    %s61 = smul.addr %s60, 8
    %s62 = scalar_lea.vmem %s0, %s61
    %s63 = sadd.s32 0, 0
    %p64 = scmp.lt.s32.totalorder %s63, 0
    %s65 = scalar_select %p64, %s63, 0
    %s66 = smul.u32 4, %s65
    %s67 = sadd.s32 0, 0
    %p68 = scmp.lt.s32.totalorder %s67, 0
    %s69 = scalar_select %p68, %s67, 0
    %s70 = smul.u32 4, %s69
    %p71 = scmp.lt.s32.totalorder %s70, 3
    %s72 = scalar_select %p71, %s70, 3
    %s73 = smul.addr %s72, 8
    %s74 = scalar_lea.vmem %s1, %s73
    %s75 = sadd.s32 0, 0
    %p76 = scmp.lt.s32.totalorder %s75, 0
    %s77 = scalar_select %p76, %s75, 0
    %s78 = smul.u32 4, %s77
    %p80 = scmp.eq.s32.totalorder 0, 0
    // Predicated region
    $region14: #{tpu_custom_call.1} parent=1 // pred_check
      %p81 = pneg %p80
    $region15: #{tpu_custom_call.1} parent=1 // pred_check_branch
      %83 = sbr.rel (%p81) target = $region17
    $region16: #{tpu_custom_call.1} parent=1 // pred_region
      %vm84 = vcmask 31744
      %85 = vst.msk [vmem:[#allocation2] sm:$0xff] %vm84, 0.0
    $region17: #{tpu_custom_call.1} parent=1 // pred_fallthru
      _
    %v86 = vld [vmem:[%s62] sm:$0xff]
    %v87 = vld [vmem:[%s62 + $0x8] sm:$0xff]
    %v88 = vld [vmem:[%s62 + $0x10] sm:$0xff]
    %v89 = vld [vmem:[%s62 + $0x18] sm:$0xff]
    %v90 = vld [vmem:[%s74] sm:$0xff]
    %v91 = vld [vmem:[%s74 + $0x8] sm:$0xff]
    %v92 = vld [vmem:[%s74 + $0x10] sm:$0xff]
    %v93 = vld [vmem:[%s74 + $0x18] sm:$0xff]
    %v94 = vld [vmem:[%s2] sm:$0xf]
    %v95 = vld [vmem:[%s2 + $0x4] sm:$0xf]
    %v96 = vld [vmem:[%s2 + $0x8] sm:$0xf]
    %v97 = vld [vmem:[%s2 + $0xc] sm:$0xf]
    %v98 = vld [vmem:[%s2 + $0x10] sm:$0xf]
    %v99 = vld [vmem:[%s2 + $0x14] sm:$0xf]
    %v100 = vld [vmem:[%s2 + $0x18] sm:$0xf]
    %v101 = vld [vmem:[%s2 + $0x1c] sm:$0xf]
    %v102 = vld [vmem:[%s2 + $0x20] sm:$0xf]
    %v103 = vld [vmem:[%s2 + $0x24] sm:$0xf]
    %v104 = vld [vmem:[%s2 + $0x28] sm:$0xf]
    %v105 = vld [vmem:[%s2 + $0x2c] sm:$0xf]
    %v106 = vld [vmem:[%s2 + $0x30] sm:$0xf]
    %v107 = vld [vmem:[%s2 + $0x34] sm:$0xf]
    %v108 = vld [vmem:[%s2 + $0x38] sm:$0xf]
    %v109 = vld [vmem:[%s2 + $0x3c] sm:$0xf]
    %v110 = vld [vmem:[%s2 + $0x40] sm:$0xf]
    %v111 = vld [vmem:[%s2 + $0x44] sm:$0xf]
    %v112 = vld [vmem:[%s2 + $0x48] sm:$0xf]
    %v113 = vld [vmem:[%s2 + $0x4c] sm:$0xf]
    %v114 = vld [vmem:[%s2 + $0x50] sm:$0xf]
    %v115 = vld [vmem:[%s2 + $0x54] sm:$0xf]
    %v116 = vld [vmem:[%s2 + $0x58] sm:$0xf]
    %v117 = vld [vmem:[%s2 + $0x5c] sm:$0xf]
    %v118 = vld [vmem:[%s2 + $0x60] sm:$0xf]
    %v119 = vld [vmem:[%s2 + $0x64] sm:$0xf]
    %v120 = vld [vmem:[%s2 + $0x68] sm:$0xf]
    %v121 = vld [vmem:[%s2 + $0x6c] sm:$0xf]
    %v122 = vld [vmem:[%s2 + $0x70] sm:$0xf]
    %v123 = vld [vmem:[%s2 + $0x74] sm:$0xf]
    %v124 = vld [vmem:[%s2 + $0x78] sm:$0xf]
    %v125 = vld [vmem:[%s2 + $0x7c] sm:$0xf]
    %v126 = vmul.f32 %v86, %v90
    %v127 = vmul.f32 %v87, %v91
    %v128 = vmul.f32 %v88, %v92
    %v129 = vmul.f32 %v89, %v93
    %v130 = vpack.c.bf16 %v127, %v126
    %v131 = vpack.c.bf16 %v129, %v128
    %v132 = vunpack.c.l.bf16 %v130
    %v133 = vunpack.c.h.bf16 %v130
    %v134 = vunpack.c.l.bf16 %v131
    %v135 = vunpack.c.h.bf16 %v131
    %v136 = vsub.f32 %v126, %v132
    %v137 = vsub.f32 %v127, %v133
    %v138 = vsub.f32 %v128, %v134
    %v139 = vsub.f32 %v129, %v135
    %v140 = vpack.c.bf16 %v137, %v136
    %v141 = vpack.c.bf16 %v139, %v138
    %v174 = vunpack.c.l.b16 %v94
    %v175 = vunpack.c.l.b16 %v95
    %v176 = vunpack.c.l.b16 %v96
    %v177 = vunpack.c.l.b16 %v97
    %v178 = vunpack.c.l.b16 %v98
    %v179 = vunpack.c.l.b16 %v99
    %v180 = vunpack.c.l.b16 %v100
    %v181 = vunpack.c.l.b16 %v101
    %v182 = vunpack.c.l.b16 %v102
    %v183 = vunpack.c.l.b16 %v103
    %v184 = vunpack.c.l.b16 %v104
    %v185 = vunpack.c.l.b16 %v105
    %v186 = vunpack.c.l.b16 %v106
    %v187 = vunpack.c.l.b16 %v107
    %v188 = vunpack.c.l.b16 %v108
    %v189 = vunpack.c.l.b16 %v109
    %v190 = vunpack.c.l.b16 %v110
    %v191 = vunpack.c.l.b16 %v111
    %v192 = vunpack.c.l.b16 %v112
    %v193 = vunpack.c.l.b16 %v113
    %v194 = vunpack.c.l.b16 %v114
    %v195 = vunpack.c.l.b16 %v115
    %v196 = vunpack.c.l.b16 %v116
    %v197 = vunpack.c.l.b16 %v117
    %v198 = vunpack.c.l.b16 %v118
    %v199 = vunpack.c.l.b16 %v119
    %v200 = vunpack.c.l.b16 %v120
    %v201 = vunpack.c.l.b16 %v121
    %v202 = vunpack.c.l.b16 %v122
    %v203 = vunpack.c.l.b16 %v123
    %v204 = vunpack.c.l.b16 %v124
    %v205 = vunpack.c.l.b16 %v125
    %v206 = vpack.c.b16 %v175, %v174
    %v207 = vpack.c.b16 %v177, %v176
    %v208 = vpack.c.b16 %v179, %v178
    %v209 = vpack.c.b16 %v181, %v180
    %v210 = vpack.c.b16 %v183, %v182
    %v211 = vpack.c.b16 %v185, %v184
    %v212 = vpack.c.b16 %v187, %v186
    %v213 = vpack.c.b16 %v189, %v188
    %v214 = vpack.c.b16 %v191, %v190
    %v215 = vpack.c.b16 %v193, %v192
    %v216 = vpack.c.b16 %v195, %v194
    %v217 = vpack.c.b16 %v197, %v196
    %v218 = vpack.c.b16 %v199, %v198
    %v219 = vpack.c.b16 %v201, %v200
    %v220 = vpack.c.b16 %v203, %v202
    %v221 = vpack.c.b16 %v205, %v204
    %238 = vmatprep.subr.bf16.mxu0 0
    %239 = vmatpush1.bf16.msra.mxu0 %v213
    %240 = vmatprep.subr.bf16.mxu0 0
    %241 = vmatpush1.bf16.msra.mxu0 %v212
    %242 = vmatprep.subr.bf16.mxu0 0
    %243 = vmatpush1.bf16.msra.mxu0 %v211
    %244 = vmatprep.subr.bf16.mxu0 0
    %245 = vmatpush1.bf16.msra.mxu0 %v210
    %246 = vmatprep.subr.bf16.mxu0 0
    %247 = vmatpush1.bf16.msra.mxu0 %v209
    %248 = vmatprep.subr.bf16.mxu0 0
    %249 = vmatpush1.bf16.msra.mxu0 %v208
    %250 = vmatprep.subr.bf16.mxu0 0
    %251 = vmatpush1.bf16.msra.mxu0 %v207
    %252 = vmatprep.subr.bf16.mxu0 0
    %253 = vmatpush1.bf16.msra.mxu0 %v206
    %254 = vmatprep.subr.bf16.mxu0 0
    %255 = vmatpush2.bf16.msra.mxu0 %v221
    %256 = vmatprep.subr.bf16.mxu0 0
    %257 = vmatpush2.bf16.msra.mxu0 %v220
    %258 = vmatprep.subr.bf16.mxu0 0
    %259 = vmatpush2.bf16.msra.mxu0 %v219
    %260 = vmatprep.subr.bf16.mxu0 0
    %261 = vmatpush2.bf16.msra.mxu0 %v218
    %262 = vmatprep.subr.bf16.mxu0 0
    %263 = vmatpush2.bf16.msra.mxu0 %v217
    %264 = vmatprep.subr.bf16.mxu0 0
    %265 = vmatpush2.bf16.msra.mxu0 %v216
    %266 = vmatprep.subr.bf16.mxu0 0
    %267 = vmatpush2.bf16.msra.mxu0 %v215
    %268 = vmatprep.subr.bf16.mxu0 0
    %269 = vmatpush2.bf16.msra.mxu0 %v214
    %270 = vmatprep.mubr.bf16.mxu0 %v140
    %271 = vmatmul.mubr.bf16.gmra.mxu0 %v130
    %v272 = vpop.f32.mrf.mxu0
    %v273 = vadd.f32 0.0, %v272
    %v274 = vpop.f32.mrf.mxu0
    %v275 = vpop.f32.mrf.mxu0
    %v276 = vadd.f32 0.0, %v275
    %v277 = vpop.f32.mrf.mxu0
    %278 = vmatprep.mubr.bf16.mxu0 %v141
    %279 = vmatmul.mubr.bf16.gmra.mxu0 %v131
    %v280 = vpop.f32.mrf.mxu0
    %v281 = vadd.f32 0.0, %v280
    %v282 = vpop.f32.mrf.mxu0
    %v283 = vpop.f32.mrf.mxu0
    %v284 = vadd.f32 0.0, %v283
    %v285 = vpop.f32.mrf.mxu0
    %286 = vdwg.mxu0
    %v287 = vmul.f32 %v86, %v86
    %v288 = vmul.f32 %v87, %v87
    %v289 = vmul.f32 %v88, %v88
    %v290 = vmul.f32 %v89, %v89
    %v291 = vpack.c.bf16 %v288, %v287
    %v292 = vpack.c.bf16 %v290, %v289
    %v293 = vunpack.c.l.bf16 %v291
    %v294 = vunpack.c.h.bf16 %v291
    %v295 = vunpack.c.l.bf16 %v292
    %v296 = vunpack.c.h.bf16 %v292
    %v297 = vsub.f32 %v287, %v293
    %v298 = vsub.f32 %v288, %v294
    %v299 = vsub.f32 %v289, %v295
    %v300 = vsub.f32 %v290, %v296
    %v301 = vpack.c.bf16 %v298, %v297
    %v302 = vpack.c.bf16 %v300, %v299
    %303 = vmatprep.subr.bf16.mxu0 0
    %304 = vmatpush1.bf16.msra.mxu0 %v213
    %305 = vmatprep.subr.bf16.mxu0 0
    %306 = vmatpush1.bf16.msra.mxu0 %v212
    %307 = vmatprep.subr.bf16.mxu0 0
    %308 = vmatpush1.bf16.msra.mxu0 %v211
    %309 = vmatprep.subr.bf16.mxu0 0
    %310 = vmatpush1.bf16.msra.mxu0 %v210
    %311 = vmatprep.subr.bf16.mxu0 0
    %312 = vmatpush1.bf16.msra.mxu0 %v209
    %313 = vmatprep.subr.bf16.mxu0 0
    %314 = vmatpush1.bf16.msra.mxu0 %v208
    %315 = vmatprep.subr.bf16.mxu0 0
    %316 = vmatpush1.bf16.msra.mxu0 %v207
    %317 = vmatprep.subr.bf16.mxu0 0
    %318 = vmatpush1.bf16.msra.mxu0 %v206
    %319 = vmatprep.subr.bf16.mxu0 0
    %320 = vmatpush2.bf16.msra.mxu0 %v221
    %321 = vmatprep.subr.bf16.mxu0 0
    %322 = vmatpush2.bf16.msra.mxu0 %v220
    %323 = vmatprep.subr.bf16.mxu0 0
    %324 = vmatpush2.bf16.msra.mxu0 %v219
    %325 = vmatprep.subr.bf16.mxu0 0
    %326 = vmatpush2.bf16.msra.mxu0 %v218
    %327 = vmatprep.subr.bf16.mxu0 0
    %328 = vmatpush2.bf16.msra.mxu0 %v217
    %329 = vmatprep.subr.bf16.mxu0 0
    %330 = vmatpush2.bf16.msra.mxu0 %v216
    %331 = vmatprep.subr.bf16.mxu0 0
    %332 = vmatpush2.bf16.msra.mxu0 %v215
    %333 = vmatprep.subr.bf16.mxu0 0
    %334 = vmatpush2.bf16.msra.mxu0 %v214
    %335 = vmatprep.mubr.bf16.mxu0 %v301
    %336 = vmatmul.mubr.bf16.gmra.mxu0 %v291
    %v337 = vpop.f32.mrf.mxu0
    %v338 = vadd.f32 0.0, %v337
    %v339 = vpop.f32.mrf.mxu0
    %v340 = vpop.f32.mrf.mxu0
    %v341 = vadd.f32 0.0, %v340
    %v342 = vpop.f32.mrf.mxu0
    %343 = vmatprep.mubr.bf16.mxu0 %v302
    %344 = vmatmul.mubr.bf16.gmra.mxu0 %v292
    %v345 = vpop.f32.mrf.mxu0
    %v346 = vadd.f32 0.0, %v345
    %v347 = vpop.f32.mrf.mxu0
    %v348 = vpop.f32.mrf.mxu0
    %v349 = vadd.f32 0.0, %v348
    %v350 = vpop.f32.mrf.mxu0
    %351 = vdwg.mxu0
    %v352 = vmul.f32 %v90, %v90
    %v353 = vmul.f32 %v91, %v91
    %v354 = vmul.f32 %v92, %v92
    %v355 = vmul.f32 %v93, %v93
    %v356 = vpack.c.bf16 %v353, %v352
    %v357 = vpack.c.bf16 %v355, %v354
    %v358 = vunpack.c.l.bf16 %v356
    %v359 = vunpack.c.h.bf16 %v356
    %v360 = vunpack.c.l.bf16 %v357
    %v361 = vunpack.c.h.bf16 %v357
    %v362 = vsub.f32 %v352, %v358
    %v363 = vsub.f32 %v353, %v359
    %v364 = vsub.f32 %v354, %v360
    %v365 = vsub.f32 %v355, %v361
    %v366 = vpack.c.bf16 %v363, %v362
    %v367 = vpack.c.bf16 %v365, %v364
    %368 = vmatprep.subr.bf16.mxu0 0
    %369 = vmatpush1.bf16.msra.mxu0 %v213
    %370 = vmatprep.subr.bf16.mxu0 0
    %371 = vmatpush1.bf16.msra.mxu0 %v212
    %372 = vmatprep.subr.bf16.mxu0 0
    %373 = vmatpush1.bf16.msra.mxu0 %v211
    %374 = vmatprep.subr.bf16.mxu0 0
    %375 = vmatpush1.bf16.msra.mxu0 %v210
    %376 = vmatprep.subr.bf16.mxu0 0
    %377 = vmatpush1.bf16.msra.mxu0 %v209
    %378 = vmatprep.subr.bf16.mxu0 0
    %379 = vmatpush1.bf16.msra.mxu0 %v208
    %380 = vmatprep.subr.bf16.mxu0 0
    %381 = vmatpush1.bf16.msra.mxu0 %v207
    %382 = vmatprep.subr.bf16.mxu0 0
    %383 = vmatpush1.bf16.msra.mxu0 %v206
    %384 = vmatprep.subr.bf16.mxu0 0
    %385 = vmatpush2.bf16.msra.mxu0 %v221
    %386 = vmatprep.subr.bf16.mxu0 0
    %387 = vmatpush2.bf16.msra.mxu0 %v220
    %388 = vmatprep.subr.bf16.mxu0 0
    %389 = vmatpush2.bf16.msra.mxu0 %v219
    %390 = vmatprep.subr.bf16.mxu0 0
    %391 = vmatpush2.bf16.msra.mxu0 %v218
    %392 = vmatprep.subr.bf16.mxu0 0
    %393 = vmatpush2.bf16.msra.mxu0 %v217
    %394 = vmatprep.subr.bf16.mxu0 0
    %395 = vmatpush2.bf16.msra.mxu0 %v216
    %396 = vmatprep.subr.bf16.mxu0 0
    %397 = vmatpush2.bf16.msra.mxu0 %v215
    %398 = vmatprep.subr.bf16.mxu0 0
    %399 = vmatpush2.bf16.msra.mxu0 %v214
    %400 = vmatprep.mubr.bf16.mxu0 %v366
    %401 = vmatmul.mubr.bf16.gmra.mxu0 %v356
    %v402 = vpop.f32.mrf.mxu0
    %v403 = vadd.f32 0.0, %v402
    %v404 = vpop.f32.mrf.mxu0
    %v405 = vpop.f32.mrf.mxu0
    %v406 = vadd.f32 0.0, %v405
    %v407 = vpop.f32.mrf.mxu0
    %408 = vmatprep.mubr.bf16.mxu0 %v367
    %409 = vmatmul.mubr.bf16.gmra.mxu0 %v357
    %v410 = vpop.f32.mrf.mxu0
    %v411 = vadd.f32 0.0, %v410
    %v412 = vpop.f32.mrf.mxu0
    %v413 = vpop.f32.mrf.mxu0
    %v414 = vadd.f32 0.0, %v413
    %v415 = vpop.f32.mrf.mxu0
    %416 = vdwg.mxu0
    %v417 = vrsqrt.pop %v338
    %v418 = vrsqrt.pop %v341
    %v419 = vrsqrt.pop %v346
    %v420 = vrsqrt.pop %v349
    %v421 = vmul.f32 %v273, %v417
    %v422 = vmul.f32 %v276, %v418
    %v423 = vmul.f32 %v281, %v419
    %v424 = vmul.f32 %v284, %v420
    %v425 = vrsqrt.pop %v403
    %v426 = vrsqrt.pop %v406
    %v427 = vrsqrt.pop %v411
    %v428 = vrsqrt.pop %v414
    %v429 = vmul.f32 %v421, %v425
    %v430 = vmul.f32 %v422, %v426
    %v431 = vmul.f32 %v423, %v427
    %v432 = vmul.f32 %v424, %v428
    %v433 = vld [vmem:[#allocation2] sm:$0xff]
    %vm434 = vcmask 31744
    %v435 = vsel %vm434, %v429, 0.0
    %v436 = vsel %vm434, %v430, 0.0
    %v437 = vadd.f32 %v435, %v436
    %v438 = vsel %vm434, %v431, 0.0
    %v439 = vadd.f32 %v437, %v438
    %v440 = vsel %vm434, %v432, 0.0
    %v441 = vadd.f32 %v439, %v440
    %v442 = vadd.f32 %v433, %v441
    %443 = vst.msk [vmem:[#allocation2] sm:$0xff] %vm434, %v442
    // Predicated region
    $region18: #{tpu_custom_call.1} parent=1 // pred_check
      %p444 = pneg %p80
    $region19: #{tpu_custom_call.1} parent=1 // pred_check_branch
      %446 = sbr.rel (%p444) target = $region21
    $region20: #{tpu_custom_call.1} parent=1 // pred_region
      %v447 = vld [vmem:[#allocation2] sm:$0xff]
      %v448 = vsel %vm434, %v447, 0.0
      %449 = vadd.xlane.f32.xlu0 %v448
      %v450 = vpop.xlane.xlu0 %449
      %v451 = vrot.slane %v450, 4
      %v452 = vadd.f32 %v450, %v451
      %v453 = vrot.slane %v452, 2
      %v454 = vadd.f32 %v452, %v453
      %v455 = vrot.slane %v454, 1
      %v456 = vadd.f32 %v454, %v455
      %s457 = vtos %v456
      %v458 = vstv %s457
      %v459 = vadd.f32 %v458, 0.0
      %460 = vst [vmem:[#allocation3] sm:$0xff] %v459
    $region21: #{tpu_custom_call.1} parent=1 // pred_fallthru
      _
    // Predicated region
    $region22: #{tpu_custom_call.1} parent=1 // pred_check
      _
    $region23: #{tpu_custom_call.1} parent=1 // pred_check_branch
      %462 = sbr.rel (0) target = $region25
    $region24: #{tpu_custom_call.1} parent=1 // pred_region
      %s464 = ssub.s32 128, 128
      %465 = vsyncadd [#allocation4], %s464
      %s467 = sshll.u32 [#allocation3], 4
      %s468 = int_to_ptr.vmem [resolvable:$true] %s467
      %470 = dma.vmem_to_hbm [thread:$0]  %s468, 128, %s3, [#allocation4]
    $region25: #{tpu_custom_call.1} parent=1 // pred_fallthru
      _
    // Predicated region
    $region26: #{tpu_custom_call.1} parent=1 // pred_check
      _
    $region27: #{tpu_custom_call.1} parent=1 // pred_check_branch
      %472 = sbr.rel (0) target = $region29
    $region28: #{tpu_custom_call.1} parent=1 // pred_region
      %473 = dma.done [#allocation4], 128
    $region29: #{tpu_custom_call.1} parent=1 // pred_fallthru
      _
    %474 = vsyncpa [#allocation4], 1

</llo_original>
